<compile_context>
chip_gen: v5e
topology: v5e:2x2
jax: 0.10.0
libtpu: 0.0.40
codegen_flags: <defaults>
</compile_context>

<pallas_src>
import jax
import jax.numpy as jnp
from jax.experimental import pallas as pl
from jax.experimental.pallas import tpu as pltpu

INPUT_SIZE = 6   # matches `input_size = 6` in the PyTorch module
LANE = 128       # TPU lane width


def _logreg_kernel(x_ref, w_ref, b_ref, o_ref):
    # x_ref: (F, TILE_B)  input tile, batch on the lane axis (f32 or bf16)
    # w_ref: (F, 1)       f32 weights (VMEM, whole array)
    # b_ref: (1,)         f32 bias scalar in SMEM
    # o_ref: (1, TILE_B)  f32 lane-dense output tile
    x = x_ref[...].astype(jnp.float32)                 # VPU cast (no-op for f32)
    w = w_ref[...]                                     # (F, 1)
    logits = jnp.sum(x * w, axis=0, keepdims=True)     # VPU mul + XLU sublane reduce
    logits = logits + b_ref[0]                         # scalar bias from SMEM
    o_ref[...] = jax.nn.sigmoid(logits)                # EUP transcendental


def _round_up(n, m):
    return ((n + m - 1) // m) * m


def logistic_regression_forward(x, w, b, *, tile_b=1024,
                                x_transfer_dtype=jnp.float32):
    """x: (B, F), w: (F, 1), b: (1,)  ->  (B, 1) f32 == sigmoid(x @ w + b)."""
    B, F = x.shape
    assert w.shape == (F, 1)

    # Lane-aligned batch tile, no larger than needed for small batches.
    tile_b = max(LANE, _round_up(min(tile_b, B), LANE))
    b_pad = _round_up(B, tile_b)
    n_tiles = b_pad // tile_b

    # Transpose so batch sits on the lane axis; zero-pad the batch tail so the
    # grid has no ragged tile (padded columns are sliced off below).
    x_t = jnp.zeros((F, b_pad), x_transfer_dtype)
    x_t = x_t.at[:, :B].set(x.astype(x_transfer_dtype).T)
    w2 = w.astype(jnp.float32)
    b1 = b.reshape(1).astype(jnp.float32)

    out_t = pl.pallas_call(
        _logreg_kernel,
        out_shape=jax.ShapeDtypeStruct((1, b_pad), jnp.float32),
        grid_spec=pltpu.PrefetchScalarGridSpec(
            num_scalar_prefetch=0,
            grid=(n_tiles,),
            in_specs=[
                # (F, TILE_B) batch tile: lane-dense, double-buffered by Pallas.
                pl.BlockSpec((F, tile_b), lambda i: (0, i)),
                # Whole weight vector, resident across the grid.
                pl.BlockSpec((F, 1), lambda i: (0, 0)),
                # Bias scalar lives in SMEM (no VMEM tile / DMA).
                pl.BlockSpec(memory_space=pltpu.MemorySpace.SMEM),
            ],
            out_specs=pl.BlockSpec((1, tile_b), lambda i: (0, i)),
        ),
        compiler_params=pltpu.CompilerParams(
            # Batch tiles are independent -> shard across both TCs on v7x.
            dimension_semantics=("parallel",),
        ),
    )(x_t, w2, b1)

    return out_t[0, :B].reshape(B, 1)


if __name__ == "__main__":
    key = jax.random.PRNGKey(0)
    k_x, k_w, k_b = jax.random.split(key, 3)

    batch = 8
    # Deterministic parameter init mimicking torch.nn.Linear default:
    # uniform(-1/sqrt(fan_in), 1/sqrt(fan_in)).
    bound = 1.0 / (INPUT_SIZE ** 0.5)
    w = jax.random.uniform(k_w, (INPUT_SIZE, 1), jnp.float32, -bound, bound)
    b = jax.random.uniform(k_b, (1,), jnp.float32, -bound, bound)

    x = jax.random.normal(k_x, (batch, INPUT_SIZE), jnp.float32)

    # Default path: f32 transfer, exact module semantics.
    out = logistic_regression_forward(x, w, b)
    out = jax.block_until_ready(out)

    ref = jax.nn.sigmoid(x @ w + b[None, :])
    assert out.shape == (batch, 1)
    assert jnp.allclose(out, ref, atol=1e-5, rtol=1e-5)

    # Optional bandwidth optimization: ship x as bf16, accumulate in f32.
    # Checked against a reference that uses the same bf16-quantized input.
    out_bf16 = logistic_regression_forward(x, w, b,
                                           x_transfer_dtype=jnp.bfloat16)
    out_bf16 = jax.block_until_ready(out_bf16)
    x_q = x.astype(jnp.bfloat16).astype(jnp.float32)
    ref_q = jax.nn.sigmoid(x_q @ w + b[None, :])
    assert jnp.allclose(out_bf16, ref_q, atol=1e-5, rtol=1e-5)

    print("KERNEL_OK")
</pallas_src>

<mosaic_0001>
module attributes {stable_mosaic.version = 11 : i64} {
  func.func @_logreg_kernel(%arg0: i32, %arg1: memref<6x128xf32, #tpu.memory_space<vmem>>, %arg2: memref<6x1xf32, #tpu.memory_space<vmem>>, %arg3: memref<1xf32, #tpu.memory_space<smem>>, %arg4: memref<1x128xf32, #tpu.memory_space<vmem>>) attributes {dimension_semantics = [#tpu.dimension_semantics<parallel>], iteration_bounds = array<i64: 1>, scalar_prefetch = 0 : i64, scratch_operands = 0 : i64, tpu.core_type = #tpu.core_type<tc>, window_params = [{transform_indices = @transform_0, window_bounds = array<i64: 6, 128>}, {pipeline_mode = #tpu.pipeline_mode<synchronous>, transform_indices = @transform_1, window_bounds = array<i64: 6, 1>}, {transform_indices = @transform_2, window_bounds = array<i64: 1>}, {transform_indices = @transform_3, window_bounds = array<i64: 1, 128>}]} {
    %c0 = arith.constant 0 : index
    %c0_0 = arith.constant 0 : index
    %0 = vector.load %arg1[%c0, %c0_0] : memref<6x128xf32, #tpu.memory_space<vmem>>, vector<6x128xf32>
    %c0_1 = arith.constant 0 : index
    %c0_2 = arith.constant 0 : index
    %1 = vector.load %arg2[%c0_1, %c0_2] : memref<6x1xf32, #tpu.memory_space<vmem>>, vector<6x1xf32>
    %2 = vector.broadcast %1 : vector<6x1xf32> to vector<6x128xf32>
    %3 = arith.mulf %0, %2 : vector<6x128xf32>
    %cst = arith.constant dense<0.000000e+00> : vector<128xf32>
    %4 = vector.multi_reduction <add>, %3, %cst [0] : vector<6x128xf32> to vector<128xf32>
    %5 = vector.shape_cast %4 : vector<128xf32> to vector<1x128xf32>
    %c0_3 = arith.constant 0 : index
    %6 = memref.load %arg3[%c0_3] : memref<1xf32, #tpu.memory_space<smem>>
    %7 = vector.broadcast %6 : f32 to vector<1x128xf32>
    %8 = arith.addf %5, %7 : vector<1x128xf32>
    %9 = arith.negf %8 : vector<1x128xf32>
    %10 = math.exp %9 : vector<1x128xf32>
    %cst_4 = arith.constant 1.000000e+00 : f32
    %11 = vector.broadcast %cst_4 : f32 to vector<1x128xf32>
    %12 = arith.addf %11, %10 : vector<1x128xf32>
    %13 = arith.divf %11, %12 : vector<1x128xf32>
    %c0_5 = arith.constant 0 : index
    %c0_6 = arith.constant 0 : index
    %14 = vector.load %arg4[%c0_5, %c0_6] : memref<1x128xf32, #tpu.memory_space<vmem>>, vector<1x128xf32>
    tpu.vector_store %arg4[%c0_5, %c0_6], %13 {strides = array<i32>} : memref<1x128xf32, #tpu.memory_space<vmem>>, vector<1x128xf32>,
    return
  }
  func.func @transform_0(%arg0: i32) -> (i32, i32) {
    %c0_i32 = arith.constant 0 : i32
    %c0_i32_0 = arith.constant 0 : i32
    return %c0_i32, %arg0 : i32, i32
  }
  func.func @transform_1(%arg0: i32) -> (i32, i32) {
    %c0_i32 = arith.constant 0 : i32
    %c0_i32_0 = arith.constant 0 : i32
    %c0_i32_1 = arith.constant 0 : i32
    return %c0_i32, %c0_i32_0 : i32, i32
  }
  func.func @transform_2(%arg0: i32) -> i32 {
    %c0_i32 = arith.constant 0 : i32
    %c0_i32_0 = arith.constant 0 : i32
    return %c0_i32 : i32
  }
  func.func @transform_3(%arg0: i32) -> (i32, i32) {
    %c0_i32 = arith.constant 0 : i32
    %c0_i32_0 = arith.constant 0 : i32
    return %c0_i32, %arg0 : i32, i32
  }
}

</mosaic_0001>

<llo_original>
// kernel: tpu_custom_call.1
$region0: #{tpu_custom_call.1}
  #allocation0 [shape = 'u32[]', space=smem, size = 0x4, offset = 0x4, fixed_abs, tag = 'smem constant byte address 0x4 - core index']
  #allocation1 [shape = 'u32[72,128]{1,0:T(1,128)}', space=vmem, size = 0x9000, scoped, tag = 'internal scratch']
  #allocation2 [shape = 'f32[1]{0:T(128)S(6)}', space=smem, size = 0x200, scoped, tag = 'scoped memory for tpu_custom_call.1']
  %s0 = inlined_call_operand.vmem [shape: f32[6,128], index: 0, kind: input, shape index: {}]
  %s1 = inlined_call_operand.vmem [shape: f32[6,1], index: 1, kind: input, shape index: {}]
  %s2 = inlined_call_operand.<no memory space> [shape: f32[1], index: 2, kind: input, shape index: {}]
  %s3 = inlined_call_operand.hbm [shape: f32[1,128], index: 3, kind: output, shape index: {}]
  %s4 = sld [smem:[#allocation0]]
  $region22: #{tpu_custom_call.1} parent=0
    _
  %s6 = ssub.s32 1, %s4
  %s7 = scalar_select 0, %s6, %s4
  %8 = sst [smem:[#allocation2]] %s2
  $region1: #{tpu_custom_call.1} parent=0
    #allocation3 [shape = 'u8[512]{0}', space=vmem, size = 0x400, scoped, tag = 'output window, operand 0, single buffered']
    #allocation4 [shape = 's32[1]{0}', space=sflag, size = 0x4, scoped, tag = 'scoped memory for tpu_custom_call.1']
    %9 = vsyncpa [#allocation4], 0
    // Predicated region
    $region2: #{tpu_custom_call.1} parent=1 // pred_check
      _
    $region3: #{tpu_custom_call.1} parent=1 // pred_check_branch
      %11 = sbr.rel (0) target = $region5
    $region4: #{tpu_custom_call.1} parent=1 // pred_region
      _
    $region5: #{tpu_custom_call.1} parent=1 // pred_fallthru
      _
    // Predicated region
    $region6: #{tpu_custom_call.1} parent=1 // pred_check
      _
    $region7: #{tpu_custom_call.1} parent=1 // pred_check_branch
      %13 = sbr.rel (0) target = $region9
    $region8: #{tpu_custom_call.1} parent=1 // pred_region
      _
    $region9: #{tpu_custom_call.1} parent=1 // pred_fallthru
      _
    // Predicated region
    $region10: #{tpu_custom_call.1} parent=1 // pred_check
      _
    $region11: #{tpu_custom_call.1} parent=1 // pred_check_branch
      %15 = sbr.rel (0) target = $region13
    $region12: #{tpu_custom_call.1} parent=1 // pred_region
      _
    $region13: #{tpu_custom_call.1} parent=1 // pred_fallthru
      _
    %v16 = vld [vmem:[%s0] sm:$0x3f]
    %v17 = vld [vmem:[%s1] sm:$0x3f]
    %19 = vset.pattern.permute.xlu0 0
    %20 = vperm.xlu0 %19, %v17
    %v21 = vpop.permute.xlu0 %20
    %v23 = vmul.f32 %v16, %v21
    %vm24 = vcmask 1045504
    %v25 = vsel %vm24, %v23, 0.0
    %v26 = vrot.slane %v25, 4
    %v27 = vadd.f32 %v25, %v26
    %v28 = vrot.slane %v27, 2
    %v29 = vadd.f32 %v27, %v28
    %v30 = vrot.slane %v29, 1
    %v31 = vadd.f32 %v29, %v30
    %s32 = sld [smem:[#allocation2]]
    %v33 = vstv %s32
    %v34 = vadd.f32 %v31, %v33
    %v35 = vxor.u32 %v34, 2147483648
    %v36 = vmul.f32 %v35, 1.442695
    %v37 = vpow.pop %v36
    %v38 = vadd.f32 %v37, 1.0
    %v39 = vrcp.pop %v38
    %v40 = vmul.f32 %v38, %v39
    %v41 = vsub.f32 1.0, %v40
    %v42 = vmul.f32 %v39, %v41
    %v43 = vadd.f32 %v39, %v42
    %vm44 = vweird.f32 %v38
    %vm45 = vweird.f32 %v39
    %vm46 = vmor %vm44, %vm45
    %v47 = vsel %vm46, %v39, %v43
    %v48 = vand.u32 2147483647, %v38
    %vm49 = vcmp.eq.f32.partialorder %v48, 8.507059e+37
    %v50 = vand.u32 %v38, 2147483648
    %v51 = vor.u32 1.1754944e-38, %v50
    %v52 = vsel %vm49, %v51, %v47
    %v53 = vmul.f32 1.0, %v52
    %54 = vst [vmem:[#allocation3] sm:$0x1] %v53
    // Predicated region
    $region14: #{tpu_custom_call.1} parent=1 // pred_check
      _
    $region15: #{tpu_custom_call.1} parent=1 // pred_check_branch
      %56 = sbr.rel (0) target = $region17
    $region16: #{tpu_custom_call.1} parent=1 // pred_region
      %58 = vsyncadd [#allocation4], 0
      %s60 = sshll.u32 [#allocation3], 4
      %s61 = int_to_ptr.vmem [resolvable:$true] %s60
      %s62 = sshll.u32 %s3, 4
      %s63 = int_to_ptr.hbm [resolvable:$true] %s62
      %65 = dma.vmem_to_hbm [thread:$0]  %s61, 16, %s63, [#allocation4]
    $region17: #{tpu_custom_call.1} parent=1 // pred_fallthru
      _
    // Predicated region
    $region18: #{tpu_custom_call.1} parent=1 // pred_check
      _
    $region19: #{tpu_custom_call.1} parent=1 // pred_check_branch
      %67 = sbr.rel (0) target = $region21
    $region20: #{tpu_custom_call.1} parent=1 // pred_region
      %69 = dma.done [#allocation4], 16
    $region21: #{tpu_custom_call.1} parent=1 // pred_fallthru
      _
    %70 = vsyncpa [#allocation4], 1

</llo_original>
